<compile_context>
chip_gen: v6e
topology: v6e:2x2x1
jax: 0.10.0
libtpu: 0.0.40
codegen_flags: <defaults>
</compile_context>

<pallas_src>
import functools

import jax
import jax.numpy as jnp
from jax.experimental import pallas as pl
from jax.experimental.pallas import tpu as pltpu


def _round_up(x, m):
    return (x + m - 1) // m * m


def q_loss_kernel(state_ref, next_state_ref, side_ref, w_ref, b_ref,
                  wt_ref, bt_ref, out_ref, *, gamma, num_actions):
    """One batch tile of fused Q forward / max_q / target_q / smooth-l1.

    side_ref lanes : 0=action(as f32), 1=reward, 2=done, 3=mask
    out_ref  lanes : 0..A-1 = Q(s),  A = max_a Q_tgt(s'),  A+1 = argmax(as f32),
                     A+2 = target_q,  A+3 = per-row smooth_l1
    """
    tb = state_ref.shape[0]
    A = num_actions

    # --- forward: two separate MXU matmuls (online & target nets), bf16 in,
    #     f32 accumulation.  No in-kernel concat temporary.
    q = jnp.dot(state_ref[...], w_ref[...],
                preferred_element_type=jnp.float32) + b_ref[...]        # (tb, A)
    qn = jnp.dot(next_state_ref[...], wt_ref[...],
                 preferred_element_type=jnp.float32) + bt_ref[...]      # (tb, A)

    lane = jax.lax.broadcasted_iota(jnp.int32, (tb, A), 1)

    # --- max_q over actions (value + first-max index, torch.max semantics)
    next_max = jnp.max(qn, axis=-1, keepdims=True)                      # (tb, 1)
    argmax = jnp.min(jnp.where(qn == next_max, lane, A),
                     axis=-1, keepdims=True).astype(jnp.float32)

    action = side_ref[:, 0:1].astype(jnp.int32)   # small ints exact in f32
    reward = side_ref[:, 1:2]
    done = side_ref[:, 2:3]
    mask = side_ref[:, 3:4]

    # --- target_q: reward + max_a Q_tgt(s') * gamma * (1 - done)
    tar = reward + next_max * gamma * (1.0 - done)

    # --- cur_q = Q[i, action[i]]  (torch.index_select(q, 1, action).diagonal())
    onehot = (lane == action).astype(jnp.float32)
    cur = jnp.sum(q * onehot, axis=-1, keepdims=True)

    # --- per-row smooth_l1(mask*cur, mask*tar), beta=1.0 ('mean' in caller)
    d = mask * cur - mask * tar
    ad = jnp.abs(d)
    per = jnp.where(ad < 1.0, 0.5 * d * d, ad - 0.5)

    # Single lane-packed store: Q | max_q | argmax | target_q | loss.
    out_ref[...] = jnp.concatenate([q, next_max, argmax, tar, per], axis=-1)


def _choose_tiling(B, S, A, a_out, tile_b):
    b16 = _round_up(max(B, 1), 16)                 # bf16 sublane tile = 16 rows
    tb = min(_round_up(tile_b, 16), b16)

    def vmem_est(t):
        per_in = 2 * t * S * 2 + t * 4 * 4          # bf16 states + f32 side slab
        per_out = t * a_out * 4                     # f32 packed output
        weights = 2 * (S * A * 2 + A * 4)           # online + target (bf16 W, f32 b)
        return 2 * (per_in + per_out) + 2 * weights  # double-buffered

    # Keep one grid step's footprint well inside v7x's 64 MiB physical VMEM.
    while tb > 16 and vmem_est(tb) > 24 * 1024 * 1024:
        tb = _round_up(tb // 2, 16)

    n_tiles = -(-b16 // tb)
    if n_tiles < 2 and tb >= 32:                    # give v7x's 2nd TensorCore work
        tb = _round_up(tb // 2, 16)
        n_tiles = -(-b16 // tb)
    b_padded = n_tiles * tb
    return tb, n_tiles, b_padded, vmem_est(tb)


def q_layer_loss(state, next_state, w, b, action, reward, done, mask,
                 w_tgt=None, b_tgt=None, gamma=0.95, tile_b=512):
    """Fused forward / max_q / target_q / loss_q via one tiled Pallas call."""
    B, S = state.shape
    A = w.shape[1]
    a_out = A + 4                                   # Q lanes + maxq|argmax|tar|loss
    if w_tgt is None:                               # target net = deepcopy(self)
        w_tgt = w
    if b_tgt is None:
        b_tgt = b

    tb, n_tiles, b_padded, vmem_est = _choose_tiling(B, S, A, a_out, tile_b)

    def pad_rows(x):
        return jnp.pad(x, ((0, b_padded - B), (0, 0))) if b_padded != B else x

    state_p = pad_rows(state.astype(jnp.bfloat16))
    next_state_p = pad_rows(next_state.astype(jnp.bfloat16))
    side = jnp.stack([action.astype(jnp.float32),
                      reward.astype(jnp.float32),
                      done.astype(jnp.float32),
                      mask.astype(jnp.float32)], axis=-1)               # (B, 4)
    side_p = pad_rows(side)
    w_b = w.astype(jnp.bfloat16)
    b_f = b.astype(jnp.float32).reshape(1, A)
    wt_b = w_tgt.astype(jnp.bfloat16)
    bt_f = b_tgt.astype(jnp.float32).reshape(1, A)

    kernel = functools.partial(q_loss_kernel, gamma=float(gamma), num_actions=A)

    flops = 2 * 2 * b_padded * S * A + 16 * b_padded * A
    bytes_accessed = (2 * b_padded * S * 2          # bf16 state streams
                      + b_padded * 4 * 4            # side slab
                      + 2 * (S * A * 2 + A * 4)     # weights (fetched once)
                      + b_padded * a_out * 4)       # packed output

    packed = pl.pallas_call(
        kernel,
        out_shape=jax.ShapeDtypeStruct((b_padded, a_out), jnp.float32),
        grid_spec=pltpu.PrefetchScalarGridSpec(
            num_scalar_prefetch=0,
            grid=(n_tiles,),
            in_specs=[
                pl.BlockSpec((tb, S), lambda i: (i, 0)),      # state (bf16)
                pl.BlockSpec((tb, S), lambda i: (i, 0)),      # next_state (bf16)
                pl.BlockSpec((tb, 4), lambda i: (i, 0)),      # packed side inputs
                pl.BlockSpec((S, A), lambda i: (0, 0)),       # W      (resident)
                pl.BlockSpec((1, A), lambda i: (0, 0)),       # b      (resident)
                pl.BlockSpec((S, A), lambda i: (0, 0)),       # W_tgt  (resident)
                pl.BlockSpec((1, A), lambda i: (0, 0)),       # b_tgt  (resident)
            ],
            out_specs=pl.BlockSpec((tb, a_out), lambda i: (i, 0)),
        ),
        compiler_params=pltpu.CompilerParams(
            dimension_semantics=("parallel",),
            vmem_limit_bytes=int(min(96 * 1024 * 1024,
                                     max(16 * 1024 * 1024, 4 * vmem_est)))),
        cost_estimate=pl.CostEstimate(
            flops=flops, transcendentals=0, bytes_accessed=bytes_accessed),
    )(state_p, next_state_p, side_p, w_b, b_f, wt_b, bt_f)

    q = packed[:B, :A]
    maxq = packed[:B, A]
    argmax = packed[:B, A + 1].astype(jnp.int32)
    tar = packed[:B, A + 2]
    loss = jnp.mean(packed[:B, A + 3])   # smooth_l1 'mean' over the true batch
    return q, maxq, argmax, tar, loss


def _reference(state, next_state, w, b, w_tgt, b_tgt,
               action, reward, done, mask, gamma):
    # Same bf16-input / f32-accumulation numerics as the kernel.
    q = jnp.dot(state.astype(jnp.bfloat16), w.astype(jnp.bfloat16),
                preferred_element_type=jnp.float32) + b
    qn = jnp.dot(next_state.astype(jnp.bfloat16), w_tgt.astype(jnp.bfloat16),
                 preferred_element_type=jnp.float32) + b_tgt
    next_max = jnp.max(qn, axis=-1)
    argmax = jnp.argmax(qn, axis=-1).astype(jnp.int32)
    tar = reward + next_max * gamma * (1.0 - done)
    cur = q[jnp.arange(q.shape[0]), action]
    d = mask * cur - mask * tar
    ad = jnp.abs(d)
    per = jnp.where(ad < 1.0, 0.5 * d * d, ad - 0.5)
    return q, next_max, argmax, tar, jnp.mean(per)


if __name__ == "__main__":
    B, S, A = 8, 32, 16           # batch, state_size, action_size
    gamma = 0.95

    key = jax.random.PRNGKey(0)
    ks = jax.random.split(key, 8)
    state = jax.random.normal(ks[0], (B, S), jnp.float32)
    next_state = jax.random.normal(ks[1], (B, S), jnp.float32)
    # Deterministic "Linear(state_size, action_size)"-style init.
    bound = 1.0 / jnp.sqrt(jnp.float32(S))
    w = jax.random.uniform(ks[2], (S, A), jnp.float32, -bound, bound)
    b = jax.random.uniform(ks[3], (A,), jnp.float32, -bound, bound)
    action = jax.random.randint(ks[4], (B,), 0, A, jnp.int32)
    reward = jax.random.normal(ks[5], (B,), jnp.float32)
    done = (jax.random.uniform(ks[6], (B,)) < 0.3).astype(jnp.float32)
    mask = jnp.ones((B,), jnp.float32)

    out = q_layer_loss(state, next_state, w, b, action, reward, done, mask,
                       gamma=gamma)
    out = jax.block_until_ready(out)
    q, maxq, argmax, tar, loss = out

    rq, rmax, rargmax, rtar, rloss = _reference(
        state, next_state, w, b, w, b, action, reward, done, mask, gamma)

    assert jnp.allclose(q, rq, atol=1e-4), "Q mismatch"
    assert jnp.allclose(maxq, rmax, atol=1e-4), "max_q mismatch"
    assert jnp.array_equal(argmax, rargmax), "argmax mismatch"
    assert jnp.allclose(tar, rtar, atol=1e-4), "target_q mismatch"
    assert jnp.allclose(loss, rloss, atol=1e-4), "loss mismatch"

    print("KERNEL_OK")
</pallas_src>

<mosaic_0001>
module attributes {stable_mosaic.version = 11 : i64} {
  func.func @q_loss_kernel(%arg0: i32, %arg1: memref<16x32xbf16, #tpu.memory_space<vmem>>, %arg2: memref<16x32xbf16, #tpu.memory_space<vmem>>, %arg3: memref<16x4xf32, #tpu.memory_space<vmem>>, %arg4: memref<32x16xbf16, #tpu.memory_space<vmem>>, %arg5: memref<1x16xf32, #tpu.memory_space<vmem>>, %arg6: memref<32x16xbf16, #tpu.memory_space<vmem>>, %arg7: memref<1x16xf32, #tpu.memory_space<vmem>>, %arg8: memref<16x20xf32, #tpu.memory_space<vmem>>) attributes {dimension_semantics = [#tpu.dimension_semantics<parallel>], iteration_bounds = array<i64: 1>, scalar_prefetch = 0 : i64, scratch_operands = 0 : i64, tpu.core_type = #tpu.core_type<tc>, window_params = [{transform_indices = @transform_0, window_bounds = array<i64: 16, 32>}, {transform_indices = @transform_1, window_bounds = array<i64: 16, 32>}, {transform_indices = @transform_2, window_bounds = array<i64: 16, 4>}, {pipeline_mode = #tpu.pipeline_mode<synchronous>, transform_indices = @transform_3, window_bounds = array<i64: 32, 16>}, {pipeline_mode = #tpu.pipeline_mode<synchronous>, transform_indices = @transform_4, window_bounds = array<i64: 1, 16>}, {pipeline_mode = #tpu.pipeline_mode<synchronous>, transform_indices = @transform_5, window_bounds = array<i64: 32, 16>}, {pipeline_mode = #tpu.pipeline_mode<synchronous>, transform_indices = @transform_6, window_bounds = array<i64: 1, 16>}, {transform_indices = @transform_7, window_bounds = array<i64: 16, 20>}]} {
    %c0 = arith.constant 0 : index
    %c0_0 = arith.constant 0 : index
    %0 = vector.load %arg1[%c0, %c0_0] : memref<16x32xbf16, #tpu.memory_space<vmem>>, vector<16x32xbf16>
    %c0_1 = arith.constant 0 : index
    %c0_2 = arith.constant 0 : index
    %1 = vector.load %arg4[%c0_1, %c0_2] : memref<32x16xbf16, #tpu.memory_space<vmem>>, vector<32x16xbf16>
    %cst = arith.constant dense<0.000000e+00> : vector<16x16xf32>
    %2 = tpu.matmul %0, %1, %cst {dimension_numbers = #tpu.dot_dimension_numbers<[1], [0], [0], [1], [0, 0, 1, 1], [], []>} : vector<16x32xbf16>, vector<32x16xbf16>, vector<16x16xf32> -> vector<16x16xf32>
    %c0_3 = arith.constant 0 : index
    %c0_4 = arith.constant 0 : index
    %3 = vector.load %arg5[%c0_3, %c0_4] : memref<1x16xf32, #tpu.memory_space<vmem>>, vector<1x16xf32>
    %4 = vector.broadcast %3 : vector<1x16xf32> to vector<16x16xf32>
    %5 = arith.addf %2, %4 : vector<16x16xf32>
    %c0_5 = arith.constant 0 : index
    %c0_6 = arith.constant 0 : index
    %6 = vector.load %arg2[%c0_5, %c0_6] : memref<16x32xbf16, #tpu.memory_space<vmem>>, vector<16x32xbf16>
    %c0_7 = arith.constant 0 : index
    %c0_8 = arith.constant 0 : index
    %7 = vector.load %arg6[%c0_7, %c0_8] : memref<32x16xbf16, #tpu.memory_space<vmem>>, vector<32x16xbf16>
    %cst_9 = arith.constant dense<0.000000e+00> : vector<16x16xf32>
    %8 = tpu.matmul %6, %7, %cst_9 {dimension_numbers = #tpu.dot_dimension_numbers<[1], [0], [0], [1], [0, 0, 1, 1], [], []>} : vector<16x32xbf16>, vector<32x16xbf16>, vector<16x16xf32> -> vector<16x16xf32>
    %c0_10 = arith.constant 0 : index
    %c0_11 = arith.constant 0 : index
    %9 = vector.load %arg7[%c0_10, %c0_11] : memref<1x16xf32, #tpu.memory_space<vmem>>, vector<1x16xf32>
    %10 = vector.broadcast %9 : vector<1x16xf32> to vector<16x16xf32>
    %11 = arith.addf %8, %10 : vector<16x16xf32>
    %12 = tpu.iota {dimensions = array<i32: 1>} : vector<16x16xi32>
    %cst_12 = arith.constant dense<0xFF800000> : vector<16xf32>
    %13 = vector.multi_reduction <maximumf>, %11, %cst_12 [1] : vector<16x16xf32> to vector<16xf32>
    %14 = vector.shape_cast %13 : vector<16xf32> to vector<16x1xf32>
    %15 = vector.broadcast %14 : vector<16x1xf32> to vector<16x16xf32>
    %16 = arith.cmpf oeq, %11, %15 : vector<16x16xf32>
    %c16_i32 = arith.constant 16 : i32
    %17 = vector.broadcast %c16_i32 : i32 to vector<16x16xi32>
    %18 = arith.select %16, %12, %17 : vector<16x16xi1>, vector<16x16xi32>
    %cst_13 = arith.constant dense<2147483647> : vector<16xi32>
    %19 = vector.multi_reduction <minsi>, %18, %cst_13 [1] : vector<16x16xi32> to vector<16xi32>
    %20 = vector.shape_cast %19 : vector<16xi32> to vector<16x1xi32>
    %21 = arith.sitofp %20 : vector<16x1xi32> to vector<16x1xf32>
    %c0_14 = arith.constant 0 : index
    %c0_15 = arith.constant 0 : index
    %22 = vector.load %arg3[%c0_14, %c0_15] : memref<16x4xf32, #tpu.memory_space<vmem>>, vector<16x1xf32>
    %23 = arith.fptosi %22 : vector<16x1xf32> to vector<16x1xi32>
    %c0_16 = arith.constant 0 : index
    %c1 = arith.constant 1 : index
    %24 = vector.load %arg3[%c0_16, %c1] : memref<16x4xf32, #tpu.memory_space<vmem>>, vector<16x1xf32>
    %c0_17 = arith.constant 0 : index
    %c2 = arith.constant 2 : index
    %25 = vector.load %arg3[%c0_17, %c2] : memref<16x4xf32, #tpu.memory_space<vmem>>, vector<16x1xf32>
    %c0_18 = arith.constant 0 : index
    %c3 = arith.constant 3 : index
    %26 = vector.load %arg3[%c0_18, %c3] : memref<16x4xf32, #tpu.memory_space<vmem>>, vector<16x1xf32>
    %cst_19 = arith.constant 0.949999988 : f32
    %27 = vector.broadcast %cst_19 : f32 to vector<16x1xf32>
    %28 = arith.mulf %14, %27 : vector<16x1xf32>
    %cst_20 = arith.constant 1.000000e+00 : f32
    %29 = vector.broadcast %cst_20 : f32 to vector<16x1xf32>
    %30 = arith.subf %29, %25 : vector<16x1xf32>
    %31 = arith.mulf %28, %30 : vector<16x1xf32>
    %32 = arith.addf %24, %31 : vector<16x1xf32>
    %33 = vector.broadcast %23 : vector<16x1xi32> to vector<16x16xi32>
    %34 = arith.cmpi eq, %12, %33 : vector<16x16xi32>
    %35 = arith.extui %34 : vector<16x16xi1> to vector<16x16xi32>
    %36 = arith.sitofp %35 : vector<16x16xi32> to vector<16x16xf32>
    %37 = arith.mulf %5, %36 : vector<16x16xf32>
    %cst_21 = arith.constant dense<0.000000e+00> : vector<16xf32>
    %38 = vector.multi_reduction <add>, %37, %cst_21 [1] : vector<16x16xf32> to vector<16xf32>
    %39 = vector.shape_cast %38 : vector<16xf32> to vector<16x1xf32>
    %40 = arith.mulf %26, %39 : vector<16x1xf32>
    %41 = arith.mulf %26, %32 : vector<16x1xf32>
    %42 = arith.subf %40, %41 : vector<16x1xf32>
    %43 = math.absf %42 : vector<16x1xf32>
    %cst_22 = arith.constant 1.000000e+00 : f32
    %44 = vector.broadcast %cst_22 : f32 to vector<16x1xf32>
    %45 = arith.cmpf olt, %43, %44 : vector<16x1xf32>
    %cst_23 = arith.constant 5.000000e-01 : f32
    %46 = vector.broadcast %cst_23 : f32 to vector<16x1xf32>
    %47 = arith.mulf %46, %42 : vector<16x1xf32>
    %48 = arith.mulf %47, %42 : vector<16x1xf32>
    %cst_24 = arith.constant 5.000000e-01 : f32
    %49 = vector.broadcast %cst_24 : f32 to vector<16x1xf32>
    %50 = arith.subf %43, %49 : vector<16x1xf32>
    %51 = arith.select %45, %48, %50 : vector<16x1xi1>, vector<16x1xf32>
    %52 = tpu.concatenate %5, %14, %21, %32, %51 in 1 : vector<16x16xf32>, vector<16x1xf32>, vector<16x1xf32>, vector<16x1xf32>, vector<16x1xf32> -> vector<16x20xf32>
    %c0_25 = arith.constant 0 : index
    %c0_26 = arith.constant 0 : index
    %53 = vector.load %arg8[%c0_25, %c0_26] : memref<16x20xf32, #tpu.memory_space<vmem>>, vector<16x20xf32>
    tpu.vector_store %arg8[%c0_25, %c0_26], %52 {strides = array<i32>} : memref<16x20xf32, #tpu.memory_space<vmem>>, vector<16x20xf32>,
    return
  }
  func.func @transform_0(%arg0: i32) -> (i32, i32) {
    %c0_i32 = arith.constant 0 : i32
    %c0_i32_0 = arith.constant 0 : i32
    return %arg0, %c0_i32 : i32, i32
  }
  func.func @transform_1(%arg0: i32) -> (i32, i32) {
    %c0_i32 = arith.constant 0 : i32
    %c0_i32_0 = arith.constant 0 : i32
    return %arg0, %c0_i32 : i32, i32
  }
  func.func @transform_2(%arg0: i32) -> (i32, i32) {
    %c0_i32 = arith.constant 0 : i32
    %c0_i32_0 = arith.constant 0 : i32
    return %arg0, %c0_i32 : i32, i32
  }
  func.func @transform_3(%arg0: i32) -> (i32, i32) {
    %c0_i32 = arith.constant 0 : i32
    %c0_i32_0 = arith.constant 0 : i32
    %c0_i32_1 = arith.constant 0 : i32
    return %c0_i32, %c0_i32_0 : i32, i32
  }
  func.func @transform_4(%arg0: i32) -> (i32, i32) {
    %c0_i32 = arith.constant 0 : i32
    %c0_i32_0 = arith.constant 0 : i32
    %c0_i32_1 = arith.constant 0 : i32
    return %c0_i32, %c0_i32_0 : i32, i32
  }
  func.func @transform_5(%arg0: i32) -> (i32, i32) {
    %c0_i32 = arith.constant 0 : i32
    %c0_i32_0 = arith.constant 0 : i32
    %c0_i32_1 = arith.constant 0 : i32
    return %c0_i32, %c0_i32_0 : i32, i32
  }
  func.func @transform_6(%arg0: i32) -> (i32, i32) {
    %c0_i32 = arith.constant 0 : i32
    %c0_i32_0 = arith.constant 0 : i32
    %c0_i32_1 = arith.constant 0 : i32
    return %c0_i32, %c0_i32_0 : i32, i32
  }
  func.func @transform_7(%arg0: i32) -> (i32, i32) {
    %c0_i32 = arith.constant 0 : i32
    %c0_i32_0 = arith.constant 0 : i32
    return %arg0, %c0_i32 : i32, i32
  }
}

</mosaic_0001>

<llo_original>
// kernel: tpu_custom_call.1
$region0: #{tpu_custom_call.1}
  #allocation0 [shape = 'u32[]', space=smem, size = 0x4, offset = 0x4, fixed_abs, tag = 'smem constant byte address 0x4 - core index']
  #allocation1 [shape = 'u32[144,128]{1,0:T(1,128)}', space=vmem, size = 0x12000, scoped, tag = 'internal scratch']
  %s0 = inlined_call_operand.vmem [shape: bf16[16,32], index: 0, kind: input, shape index: {}]
  %s1 = inlined_call_operand.vmem [shape: bf16[16,32], index: 1, kind: input, shape index: {}]
  %s2 = inlined_call_operand.vmem [shape: f32[16,4], index: 2, kind: input, shape index: {}]
  %s3 = inlined_call_operand.vmem [shape: bf16[32,16], index: 3, kind: input, shape index: {}]
  %s4 = inlined_call_operand.vmem [shape: f32[1,16], index: 4, kind: input, shape index: {}]
  %s5 = inlined_call_operand.vmem [shape: bf16[32,16], index: 5, kind: input, shape index: {}]
  %s6 = inlined_call_operand.vmem [shape: f32[1,16], index: 6, kind: input, shape index: {}]
  %s7 = inlined_call_operand.hbm [shape: f32[16,20], index: 7, kind: output, shape index: {}]
  %s8 = sld [smem:[#allocation0]]
  $region38: #{tpu_custom_call.1} parent=0
    _
  %s10 = ssub.s32 1, %s8
  %s11 = scalar_select 0, %s10, %s8
  $region1: #{tpu_custom_call.1} parent=0
    #allocation2 [shape = 'u8[8192]{0}', space=vmem, size = 0x2000, scoped, tag = 'output window, operand 0, single buffered']
    #allocation3 [shape = 's32[1]{0}', space=sflag, size = 0x4, scoped, tag = 'scoped memory for tpu_custom_call.1']
    %12 = vsyncpa [#allocation3], 0
    // Predicated region
    $region2: #{tpu_custom_call.1} parent=1 // pred_check
      _
    $region3: #{tpu_custom_call.1} parent=1 // pred_check_branch
      %14 = sbr.rel (0) target = $region5
    $region4: #{tpu_custom_call.1} parent=1 // pred_region
      _
    $region5: #{tpu_custom_call.1} parent=1 // pred_fallthru
      _
    // Predicated region
    $region6: #{tpu_custom_call.1} parent=1 // pred_check
      _
    $region7: #{tpu_custom_call.1} parent=1 // pred_check_branch
      %16 = sbr.rel (0) target = $region9
    $region8: #{tpu_custom_call.1} parent=1 // pred_region
      _
    $region9: #{tpu_custom_call.1} parent=1 // pred_fallthru
      _
    // Predicated region
    $region10: #{tpu_custom_call.1} parent=1 // pred_check
      _
    $region11: #{tpu_custom_call.1} parent=1 // pred_check_branch
      %18 = sbr.rel (0) target = $region13
    $region12: #{tpu_custom_call.1} parent=1 // pred_region
      _
    $region13: #{tpu_custom_call.1} parent=1 // pred_fallthru
      _
    // Predicated region
    $region14: #{tpu_custom_call.1} parent=1 // pred_check
      _
    $region15: #{tpu_custom_call.1} parent=1 // pred_check_branch
      %20 = sbr.rel (0) target = $region17
    $region16: #{tpu_custom_call.1} parent=1 // pred_region
      _
    $region17: #{tpu_custom_call.1} parent=1 // pred_fallthru
      _
    // Predicated region
    $region18: #{tpu_custom_call.1} parent=1 // pred_check
      _
    $region19: #{tpu_custom_call.1} parent=1 // pred_check_branch
      %22 = sbr.rel (0) target = $region21
    $region20: #{tpu_custom_call.1} parent=1 // pred_region
      _
    $region21: #{tpu_custom_call.1} parent=1 // pred_fallthru
      _
    // Predicated region
    $region22: #{tpu_custom_call.1} parent=1 // pred_check
      _
    $region23: #{tpu_custom_call.1} parent=1 // pred_check_branch
      %24 = sbr.rel (0) target = $region25
    $region24: #{tpu_custom_call.1} parent=1 // pred_region
      _
    $region25: #{tpu_custom_call.1} parent=1 // pred_fallthru
      _
    // Predicated region
    $region26: #{tpu_custom_call.1} parent=1 // pred_check
      _
    $region27: #{tpu_custom_call.1} parent=1 // pred_check_branch
      %26 = sbr.rel (0) target = $region29
    $region28: #{tpu_custom_call.1} parent=1 // pred_region
      _
    $region29: #{tpu_custom_call.1} parent=1 // pred_fallthru
      _
    %v28 = vld [vmem:[%s0] sm:$0xf]
    %v29 = vld [vmem:[%s0 + $0x4] sm:$0xf]
    %v30 = vld [vmem:[%s3] sm:$0xf]
    %v31 = vld [vmem:[%s3 + $0x4] sm:$0xf]
    %v32 = vld [vmem:[%s3 + $0x8] sm:$0xf]
    %v33 = vld [vmem:[%s3 + $0xc] sm:$0xf]
    %v34 = vld [vmem:[%s4] sm:$0x1]
    %v36 = vlaneseq
    %v37 = vshrl.u32 %v36, 7
    %v38 = vsub.s32 0, %v37
    %v39 = vrot.slane %v34, %v38
    %v43 = vunpack.c.l.b16 %v28
    %v44 = vunpack.c.l.b16 %v29
    %v45 = vpack.c.b16 %v44, %v43
    %v50 = vunpack.c.l.b16 %v30
    %v51 = vunpack.c.l.b16 %v31
    %v52 = vunpack.c.l.b16 %v32
    %v53 = vunpack.c.l.b16 %v33
    %v54 = vpack.c.b16 %v51, %v50
    %v55 = vpack.c.b16 %v53, %v52
    %vm58 = vcmask 261120
    %v60 = vsel %vm58, %v45, 0
    %62 = vmatprep.subr.bf16.mxu0 0
    %63 = vmatpush1.bf16.msra.mxu0 0
    %64 = vmatprep.subr.bf16.mxu0 0
    %65 = vmatpush1.bf16.msra.mxu0 0
    %66 = vmatprep.subr.bf16.mxu0 0
    %67 = vmatpush1.bf16.msra.mxu0 0
    %68 = vmatprep.subr.bf16.mxu0 0
    %69 = vmatpush1.bf16.msra.mxu0 0
    %70 = vmatprep.subr.bf16.mxu0 0
    %71 = vmatpush1.bf16.msra.mxu0 0
    %72 = vmatprep.subr.bf16.mxu0 0
    %73 = vmatpush1.bf16.msra.mxu0 0
    %74 = vmatprep.subr.bf16.mxu0 0
    %75 = vmatpush1.bf16.msra.mxu0 %v55
    %76 = vmatprep.subr.bf16.mxu0 0
    %77 = vmatpush1.bf16.msra.mxu0 %v54
    %78 = vmatprep.subr.bf16.mxu0 0
    %79 = vmatpush2.bf16.msra.mxu0 0
    %80 = vmatprep.subr.bf16.mxu0 0
    %81 = vmatpush2.bf16.msra.mxu0 0
    %82 = vmatprep.subr.bf16.mxu0 0
    %83 = vmatpush2.bf16.msra.mxu0 0
    %84 = vmatprep.subr.bf16.mxu0 0
    %85 = vmatpush2.bf16.msra.mxu0 0
    %86 = vmatprep.subr.bf16.mxu0 0
    %87 = vmatpush2.bf16.msra.mxu0 0
    %88 = vmatprep.subr.bf16.mxu0 0
    %89 = vmatpush2.bf16.msra.mxu0 0
    %90 = vmatprep.subr.bf16.mxu0 0
    %91 = vmatpush2.bf16.msra.mxu0 0
    %92 = vmatprep.subr.bf16.mxu0 0
    %93 = vmatpush2.bf16.msra.mxu0 0
    %94 = vmatprep.mubr.bf16.mxu0 0
    %95 = vmatmul.mubr.bf16.gmra.mxu0 %v60
    %v96 = vpop.f32.mrf.mxu0
    %v97 = vadd.f32 %v39, %v96
    %v98 = vpop.f32.mrf.mxu0
    %v99 = vpop.f32.mrf.mxu0
    %v100 = vadd.f32 %v39, %v99
    %v101 = vpop.f32.mrf.mxu0
    %102 = vdwg.mxu0
    %v103 = vld [vmem:[%s1] sm:$0xf]
    %v104 = vld [vmem:[%s1 + $0x4] sm:$0xf]
    %v105 = vld [vmem:[%s5] sm:$0xf]
    %v106 = vld [vmem:[%s5 + $0x4] sm:$0xf]
    %v107 = vld [vmem:[%s5 + $0x8] sm:$0xf]
    %v108 = vld [vmem:[%s5 + $0xc] sm:$0xf]
    %v109 = vld [vmem:[%s6] sm:$0x1]
    %v111 = vlaneseq
    %v112 = vshrl.u32 %v111, 7
    %v113 = vsub.s32 0, %v112
    %v114 = vrot.slane %v109, %v113
    %v118 = vunpack.c.l.b16 %v103
    %v119 = vunpack.c.l.b16 %v104
    %v120 = vpack.c.b16 %v119, %v118
    %v125 = vunpack.c.l.b16 %v105
    %v126 = vunpack.c.l.b16 %v106
    %v127 = vunpack.c.l.b16 %v107
    %v128 = vunpack.c.l.b16 %v108
    %v129 = vpack.c.b16 %v126, %v125
    %v130 = vpack.c.b16 %v128, %v127
    %v134 = vsel %vm58, %v120, 0
    %136 = vmatprep.subr.bf16.mxu0 0
    %137 = vmatpush1.bf16.msra.mxu0 0
    %138 = vmatprep.subr.bf16.mxu0 0
    %139 = vmatpush1.bf16.msra.mxu0 0
    %140 = vmatprep.subr.bf16.mxu0 0
    %141 = vmatpush1.bf16.msra.mxu0 0
    %142 = vmatprep.subr.bf16.mxu0 0
    %143 = vmatpush1.bf16.msra.mxu0 0
    %144 = vmatprep.subr.bf16.mxu0 0
    %145 = vmatpush1.bf16.msra.mxu0 0
    %146 = vmatprep.subr.bf16.mxu0 0
    %147 = vmatpush1.bf16.msra.mxu0 0
    %148 = vmatprep.subr.bf16.mxu0 0
    %149 = vmatpush1.bf16.msra.mxu0 %v130
    %150 = vmatprep.subr.bf16.mxu0 0
    %151 = vmatpush1.bf16.msra.mxu0 %v129
    %152 = vmatprep.subr.bf16.mxu0 0
    %153 = vmatpush2.bf16.msra.mxu0 0
    %154 = vmatprep.subr.bf16.mxu0 0
    %155 = vmatpush2.bf16.msra.mxu0 0
    %156 = vmatprep.subr.bf16.mxu0 0
    %157 = vmatpush2.bf16.msra.mxu0 0
    %158 = vmatprep.subr.bf16.mxu0 0
    %159 = vmatpush2.bf16.msra.mxu0 0
    %160 = vmatprep.subr.bf16.mxu0 0
    %161 = vmatpush2.bf16.msra.mxu0 0
    %162 = vmatprep.subr.bf16.mxu0 0
    %163 = vmatpush2.bf16.msra.mxu0 0
    %164 = vmatprep.subr.bf16.mxu0 0
    %165 = vmatpush2.bf16.msra.mxu0 0
    %166 = vmatprep.subr.bf16.mxu0 0
    %167 = vmatpush2.bf16.msra.mxu0 0
    %168 = vmatprep.mubr.bf16.mxu0 0
    %169 = vmatmul.mubr.bf16.gmra.mxu0 %v134
    %v170 = vpop.f32.mrf.mxu0
    %v171 = vadd.f32 %v114, %v170
    %v172 = vpop.f32.mrf.mxu0
    %v173 = vpop.f32.mrf.mxu0
    %v174 = vadd.f32 %v114, %v173
    %v175 = vpop.f32.mrf.mxu0
    %176 = vdwg.mxu0
    %v177 = vlaneseq
    %v178 = vand.u32 %v177, 127
    %vm179 = vcmask 130048
    %v180 = vsel %vm179, %v171, -inf
    %181 = vmax.xlane.f32.xlu0 %v180
    %v182 = vpop.xlane.xlu0 %181
    %v183 = vsel %vm179, %v174, -inf
    %184 = vmax.xlane.f32.xlu0 %v183
    %v185 = vpop.xlane.xlu0 %184
    %vm186 = vcmp.eq.f32.partialorder %v171, %v182
    %vm187 = vcmp.eq.f32.partialorder %v174, %v185
    %v188 = vsel %vm186, %v178, 16
    %v189 = vsel %vm187, %v178, 16
    %v190 = vsel %vm179, %v188, 2147483647
    %v191 = vand.u32 %v190, 65535
    %v192 = vshra.s32 %v190, 16
    %v193 = vcvt.s32.f32 %v191
    %v194 = vcvt.s32.f32 %v192
    %195 = vmin.xlane.f32.xlu0 %v194
    %v196 = vpop.xlane.xlu0 %195
    %vm197 = vcmp.eq.f32.partialorder %v194, %v196
    %v198 = vsel %vm197, %v193, inf
    %199 = vmin.xlane.f32.xlu0 %v198
    %v200 = vpop.xlane.xlu0 %199
    %v201 = vcvt.f32.s32 %v200
    %v202 = vcvt.f32.s32 %v196
    %v203 = vshll.u32 %v202, 16
    %v204 = vadd.s32 %v203, %v201
    %v205 = vsel %vm179, %v189, 2147483647
    %v206 = vand.u32 %v205, 65535
    %v207 = vshra.s32 %v205, 16
    %v208 = vcvt.s32.f32 %v206
    %v209 = vcvt.s32.f32 %v207
    %210 = vmin.xlane.f32.xlu0 %v209
    %v211 = vpop.xlane.xlu0 %210
    %vm212 = vcmp.eq.f32.partialorder %v209, %v211
    %v213 = vsel %vm212, %v208, inf
    %214 = vmin.xlane.f32.xlu0 %v213
    %v215 = vpop.xlane.xlu0 %214
    %v216 = vcvt.f32.s32 %v215
    %v217 = vcvt.f32.s32 %v211
    %v218 = vshll.u32 %v217, 16
    %v219 = vadd.s32 %v218, %v216
    %v220 = vcvt.s32.f32 %v204
    %v221 = vcvt.s32.f32 %v219
    %v222 = vld [vmem:[%s2] sm:$0xff]
    %v223 = vld [vmem:[%s2 + $0x8] sm:$0xff]
    %v224 = vcvt.f32.s32.to.zero.pseudo %v222
    %v225 = vcvt.f32.s32.to.zero.pseudo %v223
    %v226 = vmul.f32 %v182, 0.95
    %v227 = vmul.f32 %v185, 0.95
    %v228 = vsub.f32 1.0, %v222
    %v229 = vsub.f32 1.0, %v223
    %v230 = vmul.f32 %v226, %v228
    %v231 = vmul.f32 %v227, %v229
    %234 = vrot.lane.b32.xlu0 %v230, 127
    %v235 = vpop.permute.xlu0 %234
    %236 = vrot.lane.b32.xlu0 %v231, 127
    %v237 = vpop.permute.xlu0 %236
    %v240 = vadd.f32 %v222, %v235
    %v241 = vadd.f32 %v223, %v237
    %242 = vset.pattern.permute.xlu0 0
    %243 = vperm.xlu0 %242, %v224
    %v244 = vpop.permute.xlu0 %243
    %245 = vset.pattern.permute.xlu0 0
    %246 = vperm.xlu0 %245, %v225
    %v247 = vpop.permute.xlu0 %246
    %vm248 = vcmp.eq.s32.totalorder %v178, %v244
    %vm249 = vcmp.eq.s32.totalorder %v178, %v247
    %v250 = vsel %vm248, 1, 0
    %v251 = vsel %vm249, 1, 0
    %v252 = vcvt.s32.f32 %v250
    %v253 = vcvt.s32.f32 %v251
    %v254 = vmul.f32 %v97, %v252
    %v255 = vmul.f32 %v100, %v253
    %v256 = vsel %vm179, %v254, 0.0
    %257 = vadd.xlane.f32.xlu0 %v256
    %v258 = vpop.xlane.xlu0 %257
    %v259 = vsel %vm179, %v255, 0.0
    %260 = vadd.xlane.f32.xlu0 %v259
    %v261 = vpop.xlane.xlu0 %260
    %v262 = vmul.f32 %v222, %v258
    %v263 = vmul.f32 %v223, %v261
    %266 = vrot.lane.b32.xlu0 %v240, 2
    %v267 = vpop.permute.xlu0 %266
    %268 = vrot.lane.b32.xlu0 %v241, 2
    %v269 = vpop.permute.xlu0 %268
    %v272 = vmul.f32 %v222, %v267
    %v273 = vmul.f32 %v223, %v269
    %v274 = vsub.f32 %v262, %v272
    %v275 = vsub.f32 %v263, %v273
    %v276 = vand.u32 2147483647, %v274
    %v277 = vand.u32 2147483647, %v275
    %vm278 = vcmp.lt.f32.partialorder %v276, 1.0
    %vm279 = vcmp.lt.f32.partialorder %v277, 1.0
    %v280 = vmul.f32 %v274, 0.5
    %v281 = vmul.f32 %v275, 0.5
    %v282 = vmul.f32 %v280, %v274
    %v283 = vmul.f32 %v281, %v275
    %v284 = vsub.f32 %v276, 0.5
    %v285 = vsub.f32 %v277, 0.5
    %v286 = vsel %vm278, %v282, %v284
    %v287 = vsel %vm279, %v283, %v285
    %288 = vrot.lane.b32.xlu0 %v240, 17
    %v289 = vpop.permute.xlu0 %288
    %290 = vrot.lane.b32.xlu0 %v241, 17
    %v291 = vpop.permute.xlu0 %290
    %296 = vrot.lane.b32.xlu0 %v286, 16
    %v297 = vpop.permute.xlu0 %296
    %298 = vrot.lane.b32.xlu0 %v287, 16
    %v299 = vpop.permute.xlu0 %298
    %v302 = vsel %vm179, %v97, %v182
    %v303 = vsel %vm179, %v100, %v185
    %vm304 = vcmask 138240
    %v305 = vsel %vm304, %v302, %v220
    %v306 = vsel %vm304, %v303, %v221
    %vm307 = vcmask 146432
    %v308 = vsel %vm307, %v305, %v289
    %v309 = vsel %vm307, %v306, %v291
    %vm310 = vcmask 154624
    %v311 = vsel %vm310, %v308, %v297
    %v312 = vsel %vm310, %v309, %v299
    %vm313 = vcmask 162816
    %314 = vst.msk [vmem:[#allocation2] sm:$0xff] %vm313, %v311
    %315 = vst.msk [vmem:[#allocation2 + $0x8] sm:$0xff] %vm313, %v312
    // Predicated region
    $region30: #{tpu_custom_call.1} parent=1 // pred_check
      _
    $region31: #{tpu_custom_call.1} parent=1 // pred_check_branch
      %317 = sbr.rel (0) target = $region33
    $region32: #{tpu_custom_call.1} parent=1 // pred_region
      %s319 = ssub.s32 256, 256
      %320 = vsyncadd [#allocation3], %s319
      %s321 = sshll.u32 [#allocation2], 4
      %s322 = int_to_ptr.vmem [resolvable:$true] %s321
      %327 = dma.vmem_to_hbm [thread:$0]  %s322, 256, %s7, [#allocation3], 128, 128, 8
    $region33: #{tpu_custom_call.1} parent=1 // pred_fallthru
      _
    // Predicated region
    $region34: #{tpu_custom_call.1} parent=1 // pred_check
      _
    $region35: #{tpu_custom_call.1} parent=1 // pred_check_branch
      %329 = sbr.rel (0) target = $region37
    $region36: #{tpu_custom_call.1} parent=1 // pred_region
      %330 = dma.done [#allocation3], 256
    $region37: #{tpu_custom_call.1} parent=1 // pred_fallthru
      _
    %331 = vsyncpa [#allocation3], 1

</llo_original>
